<compile_context>
chip_gen: v7x
topology: tpu7x:2x2x1
jax: 0.10.0
libtpu: 0.0.40
codegen_flags: <defaults>
</compile_context>

<pallas_src>
import jax
import jax.numpy as jnp
from jax.experimental import pallas as pl
from jax.experimental.pallas import tpu as pltpu

BN_EPS = 1e-5


# --------------------------------------------------------------------------------------
# Pass 1: per-channel sum / sum-of-squares of y = W @ x, accumulated over all (N, HW) tiles.
# --------------------------------------------------------------------------------------
def _stats_kernel(x_ref, w_ref, sum_ref, sq_ref):
    # x_ref:   (C_in, hw_tile)   one (batch, spatial) tile, channels on sublanes
    # w_ref:   (C_out, C_in)     1x1 conv weight (constant across the grid)
    # sum_ref: (C_out, 1)        resident accumulator (same block for every grid step)
    # sq_ref:  (C_out, 1)        resident accumulator
    n = pl.program_id(0)
    t = pl.program_id(1)

    @pl.when((n == 0) & (t == 0))
    def _():
        sum_ref[...] = jnp.zeros_like(sum_ref)
        sq_ref[...] = jnp.zeros_like(sq_ref)

    # 1x1 conv over channels (MXU for large C, still fine for small C).
    y = jnp.dot(w_ref[...], x_ref[...], preferred_element_type=jnp.float32)  # (C_out, hw_tile)
    sum_ref[...] += jnp.sum(y, axis=1, keepdims=True)
    sq_ref[...] += jnp.sum(y * y, axis=1, keepdims=True)


# --------------------------------------------------------------------------------------
# Pass 2: out = relu(W_scaled @ x + shift)   where W_scaled = scale*W, shift = beta - scale*mean
# --------------------------------------------------------------------------------------
def _apply_kernel(x_ref, ws_ref, shift_ref, o_ref):
    # x_ref:     (C_in, hw_tile)
    # ws_ref:    (C_out, C_in)   BN-scale folded into the conv weight
    # shift_ref: (C_out, 1)      fused BN shift (bias cancels, so it never appears)
    # o_ref:     (C_out, hw_tile)
    y = jnp.dot(ws_ref[...], x_ref[...], preferred_element_type=jnp.float32)
    o_ref[...] = jnp.maximum(y + shift_ref[...], 0.0).astype(o_ref.dtype)


def _pick_hw_tile(hw, target=2048):
    """Largest lane-aligned tile (multiple of 128) <= target that divides HW exactly.
    Falls back to the full HW extent (block == full dim) when HW is not 128-aligned."""
    if hw % 128 != 0:
        return hw
    t = min(target, hw)
    t = (t // 128) * 128
    while hw % t != 0:
        t -= 128
    return t


def basic_conv_forward(x_nchw, weight, bias, gamma, beta, *, hw_tile_target=2048):
    """x_nchw: (N, C_in, H, W); weight: (C_out, C_in, 1, 1); bias/gamma/beta: (C_out,)."""
    del bias  # cancelled exactly by BatchNorm's mean subtraction (training-mode stats)

    N, C_in, H, W = x_nchw.shape
    C_out = weight.shape[0]
    HW = H * W
    M = N * HW

    # Free reshapes only — no transposes, no extra HBM traffic.
    x3 = x_nchw.reshape(N, C_in, HW).astype(jnp.float32)
    w2d = weight.reshape(C_out, C_in).astype(jnp.float32)

    hw_tile = _pick_hw_tile(HW, hw_tile_target)
    grid = (N, HW // hw_tile)

    # ---- Pass 1: global batch statistics (reduction over both grid axes) ----
    sums, sqs = pl.pallas_call(
        _stats_kernel,
        out_shape=(
            jax.ShapeDtypeStruct((C_out, 1), jnp.float32),
            jax.ShapeDtypeStruct((C_out, 1), jnp.float32),
        ),
        grid_spec=pltpu.PrefetchScalarGridSpec(
            num_scalar_prefetch=0,
            grid=grid,
            in_specs=[
                pl.BlockSpec((None, C_in, hw_tile), lambda n, t: (n, 0, t)),
                pl.BlockSpec((C_out, C_in), lambda n, t: (0, 0)),
            ],
            out_specs=(
                pl.BlockSpec((C_out, 1), lambda n, t: (0, 0)),
                pl.BlockSpec((C_out, 1), lambda n, t: (0, 0)),
            ),
        ),
        compiler_params=pltpu.CompilerParams(
            dimension_semantics=("arbitrary", "arbitrary")),
    )(x3, w2d)

    # ---- Tiny per-channel prep (C_out-sized; negligible): fold BN into weight/shift ----
    inv_m = 1.0 / float(M)                       # true divisor: N*H*W, not the tile size
    mean = sums * inv_m                          # (C_out, 1)
    var = jnp.maximum(sqs * inv_m - mean * mean, 0.0)   # biased variance, clamped for safety
    scale = gamma.reshape(C_out, 1).astype(jnp.float32) * jax.lax.rsqrt(var + BN_EPS)
    shift = beta.reshape(C_out, 1).astype(jnp.float32) - scale * mean
    w_scaled = scale * w2d                       # (C_out, C_in)

    cost = pl.CostEstimate(
        flops=2 * C_out * C_in * M,
        transcendentals=0,
        bytes_accessed=4 * (C_in * M + C_out * M + C_out * C_in + C_out),
    )

    # ---- Pass 2: fused conv + BN-affine + ReLU, both grid axes independent ----
    out3 = pl.pallas_call(
        _apply_kernel,
        out_shape=jax.ShapeDtypeStruct((N, C_out, HW), jnp.float32),
        grid_spec=pltpu.PrefetchScalarGridSpec(
            num_scalar_prefetch=0,
            grid=grid,
            in_specs=[
                pl.BlockSpec((None, C_in, hw_tile), lambda n, t: (n, 0, t)),
                pl.BlockSpec((C_out, C_in), lambda n, t: (0, 0)),
                pl.BlockSpec((C_out, 1), lambda n, t: (0, 0)),
            ],
            out_specs=pl.BlockSpec((None, C_out, hw_tile), lambda n, t: (n, 0, t)),
        ),
        compiler_params=pltpu.CompilerParams(
            dimension_semantics=("parallel", "parallel")),  # lets v7x shard across both TCs
        cost_estimate=cost,
    )(x3, w_scaled, shift)

    return out3.reshape(N, C_out, H, W)


def _reference(x_nchw, weight, bias, gamma, beta):
    # Plain-JAX reference matching the PyTorch module's forward (training-mode BN).
    N, C_in, H, W = x_nchw.shape
    C_out = weight.shape[0]
    x2d = jnp.transpose(x_nchw, (1, 0, 2, 3)).reshape(C_in, -1)
    y = weight.reshape(C_out, C_in) @ x2d + bias.reshape(C_out, 1)
    mean = jnp.mean(y, axis=1, keepdims=True)
    var = jnp.mean((y - mean) ** 2, axis=1, keepdims=True)
    y = gamma.reshape(C_out, 1) * (y - mean) / jnp.sqrt(var + BN_EPS) + beta.reshape(C_out, 1)
    y = jnp.maximum(y, 0.0)
    return jnp.transpose(y.reshape(C_out, N, H, W), (1, 0, 2, 3))


if __name__ == "__main__":
    # Small shapes consistent with the module (kernel_size=1, stride=1, padding=0).
    N, C_in, C_out, H, W = 2, 4, 8, 16, 16

    key = jax.random.PRNGKey(0)
    kx, kw, kb, kg, kbt = jax.random.split(key, 5)

    x = jax.random.normal(kx, (N, C_in, H, W), dtype=jnp.float32)
    fan_in = C_in * 1 * 1
    bound = 1.0 / (fan_in ** 0.5)
    weight = jax.random.uniform(kw, (C_out, C_in, 1, 1), jnp.float32, -bound, bound)
    bias = jax.random.uniform(kb, (C_out,), jnp.float32, -bound, bound)
    gamma = 1.0 + 0.1 * jax.random.normal(kg, (C_out,), jnp.float32)
    beta = 0.1 * jax.random.normal(kbt, (C_out,), jnp.float32)

    out = basic_conv_forward(x, weight, bias, gamma, beta)
    out = jax.block_until_ready(out)

    ref = _reference(x, weight, bias, gamma, beta)
    assert out.shape == (N, C_out, H, W)
    assert jnp.allclose(out, ref, atol=1e-4, rtol=1e-4), float(jnp.max(jnp.abs(out - ref)))

    print("KERNEL_OK")
</pallas_src>

<mosaic_0001>
module attributes {stable_mosaic.version = 11 : i64} {
  func.func @_stats_kernel(%arg0: i32, %arg1: i32, %arg2: memref<1x4x256xf32, #tpu.memory_space<vmem>>, %arg3: memref<8x4xf32, #tpu.memory_space<vmem>>, %arg4: memref<8x1xf32, #tpu.memory_space<vmem>>, %arg5: memref<8x1xf32, #tpu.memory_space<vmem>>) attributes {dimension_semantics = [#tpu.dimension_semantics<arbitrary>, #tpu.dimension_semantics<arbitrary>], iteration_bounds = array<i64: 2, 1>, scalar_prefetch = 0 : i64, scratch_operands = 0 : i64, tpu.core_type = #tpu.core_type<tc>, window_params = [{transform_indices = @transform_0, window_bounds = array<i64: 1, 4, 256>}, {pipeline_mode = #tpu.pipeline_mode<synchronous>, transform_indices = @transform_1, window_bounds = array<i64: 8, 4>}, {pipeline_mode = #tpu.pipeline_mode<synchronous>, transform_indices = @transform_2, window_bounds = array<i64: 8, 1>}, {pipeline_mode = #tpu.pipeline_mode<synchronous>, transform_indices = @transform_3, window_bounds = array<i64: 8, 1>}]} {
    %c0_i32 = arith.constant 0 : i32
    %0 = arith.cmpi eq, %arg0, %c0_i32 : i32
    %c0_i32_0 = arith.constant 0 : i32
    %1 = arith.cmpi eq, %arg1, %c0_i32_0 : i32
    %2 = arith.andi %0, %1 : i1
    %3 = arith.extui %2 : i1 to i32
    %c0_i32_1 = arith.constant 0 : i32
    %4 = arith.cmpi ne, %3, %c0_i32_1 : i32
    scf.if %4 {
      %cst_16 = arith.constant 0.000000e+00 : f32
      %20 = vector.broadcast %cst_16 : f32 to vector<8x1xf32>
      %c0_17 = arith.constant 0 : index
      %c0_18 = arith.constant 0 : index
      %21 = vector.load %arg4[%c0_17, %c0_18] : memref<8x1xf32, #tpu.memory_space<vmem>>, vector<8x1xf32>
      tpu.vector_store %arg4[%c0_17, %c0_18], %20 {strides = array<i32>} : memref<8x1xf32, #tpu.memory_space<vmem>>, vector<8x1xf32>,
      %cst_19 = arith.constant 0.000000e+00 : f32
      %22 = vector.broadcast %cst_19 : f32 to vector<8x1xf32>
      %c0_20 = arith.constant 0 : index
      %c0_21 = arith.constant 0 : index
      %23 = vector.load %arg5[%c0_20, %c0_21] : memref<8x1xf32, #tpu.memory_space<vmem>>, vector<8x1xf32>
      tpu.vector_store %arg5[%c0_20, %c0_21], %22 {strides = array<i32>} : memref<8x1xf32, #tpu.memory_space<vmem>>, vector<8x1xf32>,
    } else {
    }
    %c0 = arith.constant 0 : index
    %c0_2 = arith.constant 0 : index
    %5 = vector.load %arg3[%c0, %c0_2] : memref<8x4xf32, #tpu.memory_space<vmem>>, vector<8x4xf32>
    %c0_3 = arith.constant 0 : index
    %c0_4 = arith.constant 0 : index
    %c0_5 = arith.constant 0 : index
    %6 = vector.load %arg2[%c0_3, %c0_4, %c0_5] : memref<1x4x256xf32, #tpu.memory_space<vmem>>, vector<1x4x256xf32>
    %7 = vector.shape_cast %6 : vector<1x4x256xf32> to vector<4x256xf32>
    %cst = arith.constant dense<0.000000e+00> : vector<8x256xf32>
    %8 = tpu.matmul %5, %7, %cst {dimension_numbers = #tpu.dot_dimension_numbers<[1], [0], [0], [1], [0, 0, 1, 1], [], []>} : vector<8x4xf32>, vector<4x256xf32>, vector<8x256xf32> -> vector<8x256xf32>
    %c0_6 = arith.constant 0 : index
    %c0_7 = arith.constant 0 : index
    %9 = vector.load %arg4[%c0_6, %c0_7] : memref<8x1xf32, #tpu.memory_space<vmem>>, vector<8x1xf32>
    %cst_8 = arith.constant dense<0.000000e+00> : vector<8xf32>
    %10 = vector.multi_reduction <add>, %8, %cst_8 [1] : vector<8x256xf32> to vector<8xf32>
    %11 = vector.shape_cast %10 : vector<8xf32> to vector<8x1xf32>
    %12 = arith.addf %9, %11 : vector<8x1xf32>
    %c0_9 = arith.constant 0 : index
    %c0_10 = arith.constant 0 : index
    %13 = vector.load %arg4[%c0_9, %c0_10] : memref<8x1xf32, #tpu.memory_space<vmem>>, vector<8x1xf32>
    tpu.vector_store %arg4[%c0_9, %c0_10], %12 {strides = array<i32>} : memref<8x1xf32, #tpu.memory_space<vmem>>, vector<8x1xf32>,
    %c0_11 = arith.constant 0 : index
    %c0_12 = arith.constant 0 : index
    %14 = vector.load %arg5[%c0_11, %c0_12] : memref<8x1xf32, #tpu.memory_space<vmem>>, vector<8x1xf32>
    %15 = arith.mulf %8, %8 : vector<8x256xf32>
    %cst_13 = arith.constant dense<0.000000e+00> : vector<8xf32>
    %16 = vector.multi_reduction <add>, %15, %cst_13 [1] : vector<8x256xf32> to vector<8xf32>
    %17 = vector.shape_cast %16 : vector<8xf32> to vector<8x1xf32>
    %18 = arith.addf %14, %17 : vector<8x1xf32>
    %c0_14 = arith.constant 0 : index
    %c0_15 = arith.constant 0 : index
    %19 = vector.load %arg5[%c0_14, %c0_15] : memref<8x1xf32, #tpu.memory_space<vmem>>, vector<8x1xf32>
    tpu.vector_store %arg5[%c0_14, %c0_15], %18 {strides = array<i32>} : memref<8x1xf32, #tpu.memory_space<vmem>>, vector<8x1xf32>,
    return
  }
  func.func @transform_0(%arg0: i32, %arg1: i32) -> (i32, i32, i32) {
    %c0_i32 = arith.constant 0 : i32
    %c0_i32_0 = arith.constant 0 : i32
    return %arg0, %c0_i32, %arg1 : i32, i32, i32
  }
  func.func @transform_1(%arg0: i32, %arg1: i32) -> (i32, i32) {
    %c0_i32 = arith.constant 0 : i32
    %c0_i32_0 = arith.constant 0 : i32
    %c0_i32_1 = arith.constant 0 : i32
    return %c0_i32, %c0_i32_0 : i32, i32
  }
  func.func @transform_2(%arg0: i32, %arg1: i32) -> (i32, i32) {
    %c0_i32 = arith.constant 0 : i32
    %c0_i32_0 = arith.constant 0 : i32
    %c0_i32_1 = arith.constant 0 : i32
    return %c0_i32, %c0_i32_0 : i32, i32
  }
  func.func @transform_3(%arg0: i32, %arg1: i32) -> (i32, i32) {
    %c0_i32 = arith.constant 0 : i32
    %c0_i32_0 = arith.constant 0 : i32
    %c0_i32_1 = arith.constant 0 : i32
    return %c0_i32, %c0_i32_0 : i32, i32
  }
}

</mosaic_0001>

<llo_original>
// kernel: tpu_custom_call.1
$region0: #{tpu_custom_call.1}
  #allocation0 [shape = 'u32[]', space=smem, size = 0x4, offset = 0x4, fixed_abs, tag = 'smem constant byte address 0x4 - core index']
  #allocation1 [shape = 'u32[144,128]{1,0:T(1,128)}', space=vmem, size = 0x12000, scoped, tag = 'internal scratch']
  %s0 = inlined_call_operand.hbm [shape: f32[2,4,256], index: 0, kind: input, shape index: {}]
  %s1 = inlined_call_operand.vmem [shape: f32[8,4], index: 1, kind: input, shape index: {}]
  %s2 = inlined_call_operand.vmem [shape: f32[8,1], index: 2, kind: output, shape index: {0}]
  %s3 = inlined_call_operand.vmem [shape: f32[8,1], index: 3, kind: output, shape index: {1}]
  %4 = xla_tuple %s2, %s3
  %s5 = sld [smem:[#allocation0]]
  $region57: #{tpu_custom_call.1} parent=0
    _
  %s7 = ssub.s32 1, %s5
  %s8 = scalar_select 0, %s7, %s5
  $region1: #{tpu_custom_call.1} parent=0
    #allocation2 [shape = 'u8[8192]{0}', space=vmem, size = 0x2000, scoped, tag = 'input window, operand 0']
    #allocation3 [shape = 's32[2]{0}', space=sflag, size = 0x8, scoped, tag = 'scoped memory for tpu_custom_call.1']
    %9 = vsyncpa [#allocation3], 0
    %s10 = scalar_lea.sflag [#allocation3], 1
    %11 = vsyncpa %s10, 0
    loop: start=0, step=1, limit=4
    $region2: #{tpu_custom_call.1} parent=1 // loop_pre_header
      _
    $region3: #{tpu_custom_call.1} parent=1 // loop_header
      %s13 = sphi 0, %s17
      %p14 = scmp.ge.s32.totalorder %s13, 4
      %s20 = sphi 0, %s32
      %s21 = sphi 0, %s28
      %s22 = sphi 0, %s20
      %s23 = sphi 0, %s21
      %s24 = sphi 0, %s22
      %s25 = sphi 0, %s23
      %s37 = sphi 0, %s39
      %s40 = sphi 0, %s37
      %s41 = sphi 0, %s40
      %s57 = sphi 0, %s41
      %s61 = sphi 0, %s61
      %s63 = sphi 0, %s61
      %s64 = sphi 0, %s63
      %s78 = sphi 0, %s64
      %s82 = sphi 0, %s82
      %s84 = sphi 0, %s82
      %s85 = sphi 0, %s84
      %s99 = sphi 0, %s85
      %s103 = sphi 0, %s103
      %s105 = sphi 0, %s103
      %s106 = sphi 0, %s105
      %s120 = sphi 0, %s106
    $region4: #{tpu_custom_call.1} parent=1 // loop_header_branch
      %16 = sbr.rel (%p14) target = $region8
    $region5: #{tpu_custom_call.1} parent=1 // loop_body
      %s18 = ssub.s32 %s13, 1
      %s19 = ssub.s32 %s13, 2
      %s26 = sadd.s32 1, %s21
      %p27 = scmp.ge.s32.totalorder %s26, 1
      %s28 = scalar_select %p27, 0, %s26
      %s29 = sadd.s32 1, %s20
      %s30 = scalar_select %p27, %s29, %s20
      %p31 = scmp.ge.s32.totalorder %s30, 2
      %s32 = scalar_select %p31, 0, %s30
      %s33 = ssub.s32 %s20, %s32
      %s34 = ssub.s32 %s21, %s28
      %s35 = sor.u32 %s33, %s34
      %p36 = scmp.eq.s32.totalorder %s35, 0
      %s38 = sadd.s32 %s37, 1
      %s39 = scalar_select %p36, %s37, %s38
      %p42 = pneg %p36
      %p43 = scmp.eq.s32.totalorder %s13, 1
      %p44 = por %p42, %p43
      %p45 = scmp.ne.s32.totalorder %s37, %s40
      %p46 = scmp.eq.s32.totalorder %s13, 0
      %p47 = por %p45, %p46
      %p48 = scmp.ne.s32.totalorder %s37, %s40
      %p49 = scmp.eq.s32.totalorder %s18, 1
      %p50 = por %p48, %p49
      %p51 = scmp.ne.s32.totalorder %s40, %s41
      %p52 = scmp.eq.s32.totalorder %s18, 0
      %p53 = por %p51, %p52
      %p54 = scmp.ne.s32.totalorder %s40, %s41
      %p55 = scmp.eq.s32.totalorder %s19, 1
      %p56 = por %p54, %p55
      %p58 = scmp.ne.s32.totalorder %s41, %s57
      %p59 = scmp.eq.s32.totalorder %s19, 0
      %p60 = por %p58, %p59
      %s62 = sadd.s32 %s61, 1
      %p65 = scmp.eq.s32.totalorder %s13, 1
      %p66 = scmp.ne.s32.totalorder %s61, %s63
      %p67 = scmp.eq.s32.totalorder %s13, 0
      %p68 = por %p66, %p67
      %p69 = scmp.ne.s32.totalorder %s61, %s63
      %p70 = scmp.eq.s32.totalorder %s18, 1
      %p71 = por %p69, %p70
      %p72 = scmp.ne.s32.totalorder %s63, %s64
      %p73 = scmp.eq.s32.totalorder %s18, 0
      %p74 = por %p72, %p73
      %p75 = scmp.ne.s32.totalorder %s63, %s64
      %p76 = scmp.eq.s32.totalorder %s19, 1
      %p77 = por %p75, %p76
      %p79 = scmp.ne.s32.totalorder %s64, %s78
      %p80 = scmp.eq.s32.totalorder %s19, 0
      %p81 = por %p79, %p80
      %s83 = sadd.s32 %s82, 1
      %p86 = scmp.eq.s32.totalorder %s13, 1
      %p87 = scmp.ne.s32.totalorder %s82, %s84
      %p88 = scmp.eq.s32.totalorder %s13, 0
      %p89 = por %p87, %p88
      %p90 = scmp.ne.s32.totalorder %s82, %s84
      %p91 = scmp.eq.s32.totalorder %s18, 1
      %p92 = por %p90, %p91
      %p93 = scmp.ne.s32.totalorder %s84, %s85
      %p94 = scmp.eq.s32.totalorder %s18, 0
      %p95 = por %p93, %p94
      %p96 = scmp.ne.s32.totalorder %s84, %s85
      %p97 = scmp.eq.s32.totalorder %s19, 1
      %p98 = por %p96, %p97
      %p100 = scmp.ne.s32.totalorder %s85, %s99
      %p101 = scmp.eq.s32.totalorder %s19, 0
      %p102 = por %p100, %p101
      %s104 = sadd.s32 %s103, 1
      %p107 = scmp.eq.s32.totalorder %s13, 1
      %p108 = scmp.ne.s32.totalorder %s103, %s105
      %p109 = scmp.eq.s32.totalorder %s13, 0
      %p110 = por %p108, %p109
      %p111 = scmp.ne.s32.totalorder %s103, %s105
      %p112 = scmp.eq.s32.totalorder %s18, 1
      %p113 = por %p111, %p112
      %p114 = scmp.ne.s32.totalorder %s105, %s106
      %p115 = scmp.eq.s32.totalorder %s18, 0
      %p116 = por %p114, %p115
      %p117 = scmp.ne.s32.totalorder %s105, %s106
      %p118 = scmp.eq.s32.totalorder %s19, 1
      %p119 = por %p117, %p118
      %p121 = scmp.ne.s32.totalorder %s106, %s120
      %p122 = scmp.eq.s32.totalorder %s19, 0
      %p123 = por %p121, %p122
      %p124 = scmp.le.s32.totalorder 1, %s13
      %p125 = scmp.lt.s32.totalorder %s13, 3
      %p126 = pnand %p124, %p125
      %p127 = pneg %p126
      // Predicated region
      $region9: #{tpu_custom_call.1} parent=5 // pred_check
        _
      $region10: #{tpu_custom_call.1} parent=5 // pred_check_branch
        %129 = sbr.rel (%p126) target = $region12
      $region11: #{tpu_custom_call.1} parent=5 // pred_region
        %s130 = ssub.s32 %s13, 1
        // Predicated region
        $region13: #{tpu_custom_call.1} parent=11 // pred_check
          %p131 = pneg %p74
        $region14: #{tpu_custom_call.1} parent=11 // pred_check_branch
          %133 = sbr.rel (%p131) target = $region16
        $region15: #{tpu_custom_call.1} parent=11 // pred_region
          _
        $region16: #{tpu_custom_call.1} parent=11 // pred_fallthru
          _
      $region12: #{tpu_custom_call.1} parent=5 // pred_fallthru
        _
      %p134 = scmp.lt.s32.totalorder %s13, 2
      // Predicated region
      $region17: #{tpu_custom_call.1} parent=5 // pred_check
        %p135 = pneg %p134
      $region18: #{tpu_custom_call.1} parent=5 // pred_check_branch
        %137 = sbr.rel (%p135) target = $region20
      $region19: #{tpu_custom_call.1} parent=5 // pred_region
        // Predicated region
        $region21: #{tpu_custom_call.1} parent=19 // pred_check
          %p138 = pneg %p47
        $region22: #{tpu_custom_call.1} parent=19 // pred_check_branch
          %140 = sbr.rel (%p138) target = $region24
        $region23: #{tpu_custom_call.1} parent=19 // pred_region
          %s141 = sand.u32 %s37, 1
          %s142 = scalar_lea.sflag [#allocation3], %s141
          %s143 = sand.u32 %s37, 1
          %s144 = smul.addr %s143, 8
          %s145 = scalar_lea.vmem [#allocation2], %s144
          %s146 = smul.u32 2, %s21
          %s148 = ssub.s32 128, 128
          %149 = vsyncadd %s142, %s148
          %s150 = smul.addr %s20, 2
          %s151 = sadd.s32 %s146, %s150
          %s152 = smul.addr %s151, 64
          %s153 = scalar_lea.hbm %s0, %s152
          %s155 = sshll.u32 %s145, 4
          %s156 = int_to_ptr.vmem [resolvable:$true] %s155
          %158 = dma.hbm_to_vmem [thread:$0]  %s153, 128, %s156, %s142
        $region24: #{tpu_custom_call.1} parent=19 // pred_fallthru
          _
      $region20: #{tpu_custom_call.1} parent=5 // pred_fallthru
        _
      %p159 = scmp.le.s32.totalorder 1, %s13
      %p160 = scmp.lt.s32.totalorder %s13, 3
      %p161 = pnand %p159, %p160
      %p162 = pneg %p161
      // Predicated region
      $region25: #{tpu_custom_call.1} parent=5 // pred_check
        _
      $region26: #{tpu_custom_call.1} parent=5 // pred_check_branch
        %164 = sbr.rel (%p161) target = $region28
      $region27: #{tpu_custom_call.1} parent=5 // pred_region
        %s165 = ssub.s32 %s13, 1
        %s166 = sand.u32 %s40, 1
        %s167 = scalar_lea.sflag [#allocation3], %s166
        %s168 = sand.u32 %s40, 1
        %s169 = smul.addr %s168, 8
        %s170 = scalar_lea.vmem [#allocation2], %s169
        // Predicated region
        $region29: #{tpu_custom_call.1} parent=27 // pred_check
          %p171 = pneg %p53
        $region30: #{tpu_custom_call.1} parent=27 // pred_check_branch
          %173 = sbr.rel (%p171) target = $region32
        $region31: #{tpu_custom_call.1} parent=27 // pred_region
          %174 = dma.done %s167, 128
        $region32: #{tpu_custom_call.1} parent=27 // pred_fallthru
          _
        %s175 = sand.u32 %s40, 1
        %s176 = scalar_lea.sflag [#allocation3], %s175
        %s177 = sand.u32 %s40, 1
        %s178 = smul.addr %s177, 8
        %s179 = scalar_lea.vmem [#allocation2], %s178
        %p180 = pneg %p53
        %p181 = pneg %p50
        %p182 = pneg %p74
        %p183 = pneg %p71
        %p184 = pneg %p95
        %p185 = pneg %p92
        %p186 = pneg %p116
        %p187 = pneg %p113
        %s188 = smul.u32 2, %s23
        %p189 = scmp.eq.s32.totalorder %s22, 0
        %p190 = scmp.eq.s32.totalorder %s23, 0
        %p191 = pnand %p189, %p190
        %p192 = pneg %p191
        // Predicated region
        $region33: #{tpu_custom_call.1} parent=27 // pred_check
          _
        $region34: #{tpu_custom_call.1} parent=27 // pred_check_branch
          %194 = sbr.rel (%p191) target = $region36
        $region35: #{tpu_custom_call.1} parent=27 // pred_region
          %vm195 = vcmask 7168
          %196 = vst.msk [vmem:[%s2] sm:$0xff] %vm195, 0.0
          %197 = vst.msk [vmem:[%s3] sm:$0xff] %vm195, 0.0
        $region36: #{tpu_custom_call.1} parent=27 // pred_fallthru
          _
        %v198 = vld [vmem:[%s1] sm:$0xff]
        %v199 = vld [vmem:[%s170] sm:$0xff]
        %v201 = vcombine.high %v199, %v199
        %vm202 = vcmask 31744
        %v204 = vsel %vm202, %v198, 0
        %vm206 = vcmask 1043456
        %v207 = vsel %vm206, %v199, 0
        %v209 = vsel %vm206, %v201, 0
        %211 = vmatprep.subr.mxu0 %v209
        %212 = vmatpush1.msra.mxu0 %v207
        %213 = vmatprep.subr.mxu0 0.0
        %214 = vmatpush1.msra.mxu0 0.0
        %215 = vmatprep.subr.mxu0 0.0
        %216 = vmatpush1.msra.mxu0 0.0
        %217 = vmatprep.subr.mxu0 0.0
        %218 = vmatpush1.msra.mxu0 0.0
        %219 = vmatprep.subr.mxu0 0.0
        %220 = vmatpush1.msra.mxu0 0.0
        %221 = vmatprep.subr.mxu0 0.0
        %222 = vmatpush1.msra.mxu0 0.0
        %223 = vmatprep.subr.mxu0 0.0
        %224 = vmatpush1.msra.mxu0 0.0
        %225 = vmatprep.subr.mxu0 0.0
        %226 = vmatpush1.msra.mxu0 0.0
        %227 = vmatprep.subr.mxu0 0.0
        %228 = vmatpush1.msra.mxu0 0.0
        %229 = vmatprep.subr.mxu0 0.0
        %230 = vmatpush1.msra.mxu0 0.0
        %231 = vmatprep.subr.mxu0 0.0
        %232 = vmatpush1.msra.mxu0 0.0
        %233 = vmatprep.subr.mxu0 0.0
        %234 = vmatpush1.msra.mxu0 0.0
        %235 = vmatprep.subr.mxu0 0.0
        %236 = vmatpush1.msra.mxu0 0.0
        %237 = vmatprep.subr.mxu0 0.0
        %238 = vmatpush1.msra.mxu0 0.0
        %239 = vmatprep.subr.mxu0 0.0
        %240 = vmatpush1.msra.mxu0 0.0
        %241 = vmatprep.subr.mxu0 0.0
        %242 = vmatpush1.msra.mxu0 0.0
        %243 = vmatprep.subr.mxu0 0.0
        %244 = vmatpush1.msra.mxu0 0.0
        %245 = vmatprep.subr.mxu0 0.0
        %246 = vmatpush1.msra.mxu0 0.0
        %247 = vmatprep.subr.mxu0 0.0
        %248 = vmatpush1.msra.mxu0 0.0
        %249 = vmatprep.subr.mxu0 0.0
        %250 = vmatpush1.msra.mxu0 0.0
        %251 = vmatprep.subr.mxu0 0.0
        %252 = vmatpush1.msra.mxu0 0.0
        %253 = vmatprep.subr.mxu0 0.0
        %254 = vmatpush1.msra.mxu0 0.0
        %255 = vmatprep.subr.mxu0 0.0
        %256 = vmatpush1.msra.mxu0 0.0
        %257 = vmatprep.subr.mxu0 0.0
        %258 = vmatpush1.msra.mxu0 0.0
        %259 = vmatprep.subr.mxu0 0.0
        %260 = vmatpush1.msra.mxu0 0.0
        %261 = vmatprep.subr.mxu0 0.0
        %262 = vmatpush1.msra.mxu0 0.0
        %263 = vmatprep.subr.mxu0 0.0
        %264 = vmatpush1.msra.mxu0 0.0
        %265 = vmatprep.subr.mxu0 0.0
        %266 = vmatpush1.msra.mxu0 0.0
        %267 = vmatprep.subr.mxu0 0.0
        %268 = vmatpush1.msra.mxu0 0.0
        %269 = vmatprep.subr.mxu0 0.0
        %270 = vmatpush1.msra.mxu0 0.0
        %271 = vmatprep.subr.mxu0 0.0
        %272 = vmatpush1.msra.mxu0 0.0
        %273 = vmatprep.subr.mxu0 0.0
        %274 = vmatpush1.msra.mxu0 0.0
        %275 = vmatprep.mubr.f32.mxu0 0.0
        %276 = vmatmul.mubr.f32.gmra.mrb[0].mxu0 %v204
        %v277 = vpop.f32.mrb[0].mxu0
        %v278 = vadd.f32 0.0, %v277
        %v279 = vpop.f32.mrb[0].mxu0
        %v280 = vadd.f32 0.0, %v279
        %281 = vdwg.mxu0
        %v282 = vld [vmem:[%s2] sm:$0xff]
        %v283 = vadd.f32 %v278, %v280
        %284 = vadd.xlane.f32.xlu0 %v283
        %v285 = vpop.xlane.xlu0 %284
        %v286 = vadd.f32 %v282, %v285
        %vm287 = vcmask 7168
        %288 = vst.msk [vmem:[%s2] sm:$0xff] %vm287, %v286
        %v289 = vld [vmem:[%s3] sm:$0xff]
        %v290 = vmul.f32 %v278, %v278
        %v291 = vmul.f32 %v280, %v280
        %v292 = vadd.f32 %v290, %v291
        %293 = vadd.xlane.f32.xlu0 %v292
        %v294 = vpop.xlane.xlu0 %293
        %v295 = vadd.f32 %v289, %v294
        %296 = vst.msk [vmem:[%s3] sm:$0xff] %vm287, %v295
        // Predicated region
        $region37: #{tpu_custom_call.1} parent=27 // pred_check
          %p297 = pneg %p92
        $region38: #{tpu_custom_call.1} parent=27 // pred_check_branch
          %299 = sbr.rel (%p297) target = $region40
        $region39: #{tpu_custom_call.1} parent=27 // pred_region
          _
        $region40: #{tpu_custom_call.1} parent=27 // pred_fallthru
          _
        // Predicated region
        $region41: #{tpu_custom_call.1} parent=27 // pred_check
          %p300 = pneg %p113
        $region42: #{tpu_custom_call.1} parent=27 // pred_check_branch
          %302 = sbr.rel (%p300) target = $region44
        $region43: #{tpu_custom_call.1} parent=27 // pred_region
          _
        $region44: #{tpu_custom_call.1} parent=27 // pred_fallthru
          _
        // Predicated region
        $region45: #{tpu_custom_call.1} parent=27 // pred_check
          %p303 = pneg %p92
        $region46: #{tpu_custom_call.1} parent=27 // pred_check_branch
          %305 = sbr.rel (%p303) target = $region48
        $region47: #{tpu_custom_call.1} parent=27 // pred_region
          _
        $region48: #{tpu_custom_call.1} parent=27 // pred_fallthru
          _
        // Predicated region
        $region49: #{tpu_custom_call.1} parent=27 // pred_check
          %p306 = pneg %p113
        $region50: #{tpu_custom_call.1} parent=27 // pred_check_branch
          %308 = sbr.rel (%p306) target = $region52
        $region51: #{tpu_custom_call.1} parent=27 // pred_region
          _
        $region52: #{tpu_custom_call.1} parent=27 // pred_fallthru
          _
      $region28: #{tpu_custom_call.1} parent=5 // pred_fallthru
        _
      %p309 = scmp.le.s32.totalorder 2, %s13
      // Predicated region
      $region53: #{tpu_custom_call.1} parent=5 // pred_check
        %p310 = pneg %p309
      $region54: #{tpu_custom_call.1} parent=5 // pred_check_branch
        %312 = sbr.rel (%p310) target = $region56
      $region55: #{tpu_custom_call.1} parent=5 // pred_region
        %s313 = ssub.s32 %s13, 2
      $region56: #{tpu_custom_call.1} parent=5 // pred_fallthru
        _
    $region6: #{tpu_custom_call.1} parent=1 // loop_footer
      %s17 = sadd.s32 1, %s13
    $region7: #{tpu_custom_call.1} parent=1 // loop_footer_branch
      %12 = sbr.rel target = $region3
    $region8: #{tpu_custom_call.1} parent=1 // loop_exit
      _
    %314 = vsyncpa [#allocation3], 1
    %s315 = scalar_lea.sflag [#allocation3], 1
    %316 = vsyncpa %s315, 1

</llo_original>
